<compile_context>
chip_gen: v7x
topology: tpu7x:2x2x1
jax: 0.10.0
libtpu: 0.0.40
codegen_flags: <defaults>
</compile_context>

<pallas_src>
import functools

import jax
import jax.numpy as jnp
from jax.experimental import pallas as pl
from jax.experimental.pallas import tpu as pltpu


def _round_up(x, m):
    return ((x + m - 1) // m) * m


def _detect_num_tensorcores():
    """2 on v7x (dual TensorCore per chip), 1 on v5e/v6e; safe fallback is 1."""
    try:
        kind = jax.devices()[0].device_kind.lower()
    except Exception:
        return 1
    return 2 if "v7" in kind else 1


def _pick_tile_m(rows_per_core, f, itemsize, target_bytes):
    """Lane-axis tile (multiple of 128) sized so one (F, tm) buffer ~= target_bytes."""
    # sublane packing of the streamed dtype: f32 -> 8, bf16 -> 16, int8/fp8 -> 32
    sub = 8 * max(1, 4 // max(1, itemsize))
    f_pad = _round_up(max(1, f), sub)
    tm = (target_bytes // max(1, f_pad * itemsize)) // 128 * 128
    tm = max(128, tm)
    cap = _round_up(max(1, rows_per_core), 128)
    return max(128, min(tm, cap))


def _nn_g_kernel(q_ref, at_ref, asq_ref, pmin_ref, pidx_ref,
                 minv_sc, idx_sc, *, m_total, tile_m):
    # q_ref   : (B, F)     query features (matmul LHS), resident
    # at_ref  : (F, tm)    database tile, transposed: M is the lane axis (streamed)
    # asq_ref : (1, tm)    precomputed ||a||^2 per database row, f32 (streamed)
    # pmin_ref: (1, B, 1)  per-core partial min score  (written at last m step)
    # pidx_ref: (1, B, 1)  per-core partial argmin     (written at last m step)
    # minv_sc : (B, 1)     running minimum  (VMEM scratch, persists over m)
    # idx_sc  : (B, 1)     running argmin   (VMEM scratch, persists over m)
    c = pl.program_id(0)
    m = pl.program_id(1)
    n_m = pl.num_programs(1)

    @pl.when(m == 0)
    def _init():
        minv_sc[...] = jnp.full(minv_sc.shape, jnp.inf, minv_sc.dtype)
        idx_sc[...] = jnp.zeros(idx_sc.shape, idx_sc.dtype)

    # Cross term on the MXU; f32 accumulation.
    cross = jnp.dot(q_ref[...], at_ref[...],
                    preferred_element_type=jnp.float32)          # (B, tm)
    # score = ||a||^2 - 2 a.q  (q_sq and /F added once in the wrapper).
    score = asq_ref[...] - 2.0 * cross                            # (B, tm) f32

    # Mask tail-padding columns (global database row >= true M).
    col0 = (c * n_m + m) * tile_m
    col = col0 + jax.lax.broadcasted_iota(jnp.int32, score.shape, 1)
    score = jnp.where(col < m_total, score, jnp.inf)

    # Per-tile min + first-index argmin along lanes (same values -> exact).
    tile_min = jnp.min(score, axis=1, keepdims=True)              # (B, 1)
    sentinel = jnp.iinfo(jnp.int32).max
    tile_idx = jnp.min(jnp.where(score == tile_min, col, sentinel),
                       axis=1, keepdims=True)                     # (B, 1) global idx

    # Running cross-tile update; strict '<' keeps the first (lowest) index on
    # ties, matching torch.min tie-breaking.
    better = tile_min < minv_sc[...]
    minv_sc[...] = jnp.where(better, tile_min, minv_sc[...])
    idx_sc[...] = jnp.where(better, tile_idx, idx_sc[...])

    @pl.when(m == n_m - 1)
    def _finalize():
        pmin_ref[...] = minv_sc[...][None]                        # (1, B, 1)
        pidx_ref[...] = idx_sc[...][None]


def nn_g_prepare_database(audio, *, stream_dtype=None):
    """One-time DB prep (amortise across calls if the database is static).

    Returns (audio_t (F, M) in the streaming dtype, a_sq (1, M) f32)."""
    M, F = audio.shape
    dt = audio.dtype if stream_dtype is None else stream_dtype
    a32 = audio.astype(jnp.float32)
    a_sq = jnp.sum(a32 * a32, axis=1)[None, :]                    # (1, M) f32
    audio_t = audio.T.astype(dt)                                  # (F, M)
    return audio_t, a_sq


def nn_g_distance_argmin(x0, audio=None, *, prepared=None, stream_dtype=None,
                         target_tile_bytes=2 * 1024 * 1024, num_cores=None):
    """Pallas call: returns (min_mse (B,) f32, idx (B,) int32)."""
    if prepared is None:
        prepared = nn_g_prepare_database(audio, stream_dtype=stream_dtype)
    audio_t, a_sq = prepared
    F, M = audio_t.shape
    B, T, Fx = x0.shape
    assert Fx == F

    # Hoisted query prep (computed once, outside the M-streamed loop).
    q32 = x0.astype(jnp.float32).mean(axis=1)                     # (B, F) f32
    q_sq = jnp.sum(q32 * q32, axis=1)                             # (B,)   f32
    q_stream = q32.astype(audio_t.dtype)                          # (B, F) matmul LHS

    # Core split (v7x: 2 TensorCores share HBM; elsewhere 1) and byte-sized tiles.
    C = _detect_num_tensorcores() if num_cores is None else max(1, int(num_cores))
    itemsize = jnp.dtype(audio_t.dtype).itemsize
    rows_per_core = -(-M // C)
    tm = _pick_tile_m(rows_per_core, F, itemsize, target_tile_bytes)
    tiles_per_core = -(-rows_per_core // tm)
    m_pad = C * tiles_per_core * tm
    if m_pad != M:
        audio_t = jnp.pad(audio_t, ((0, 0), (0, m_pad - M)))
        a_sq = jnp.pad(a_sq, ((0, 0), (0, m_pad - M)))

    kernel = functools.partial(_nn_g_kernel, m_total=M, tile_m=tm)

    grid_spec = pltpu.PrefetchScalarGridSpec(
        num_scalar_prefetch=0,
        grid=(C, tiles_per_core),
        in_specs=[
            pl.BlockSpec((B, F), lambda c, m: (0, 0)),                       # q (resident)
            pl.BlockSpec((F, tm), lambda c, m: (0, c * tiles_per_core + m)),  # audio_t (streamed)
            pl.BlockSpec((1, tm), lambda c, m: (0, c * tiles_per_core + m)),  # ||a||^2 (streamed)
        ],
        out_specs=[
            pl.BlockSpec((1, B, 1), lambda c, m: (c, 0, 0)),
            pl.BlockSpec((1, B, 1), lambda c, m: (c, 0, 0)),
        ],
        scratch_shapes=[
            pltpu.VMEM((B, 1), jnp.float32),
            pltpu.VMEM((B, 1), jnp.int32),
        ],
    )

    pmin, pidx = pl.pallas_call(
        kernel,
        grid_spec=grid_spec,
        out_shape=(
            jax.ShapeDtypeStruct((C, B, 1), jnp.float32),
            jax.ShapeDtypeStruct((C, B, 1), jnp.int32),
        ),
        compiler_params=pltpu.CompilerParams(
            dimension_semantics=("parallel", "arbitrary"),   # cores x streamed-M
            vmem_limit_bytes=32 * 1024 * 1024,               # safe on v5e/v6e/v7x
        ),
    )(q_stream, audio_t, a_sq)

    # Combine per-core partials (argmin returns the first occurrence on ties,
    # and chunk c covers strictly smaller global indices than chunk c+1, so the
    # global first-index tie-break is preserved).
    pmin = pmin[:, :, 0]                                          # (C, B)
    pidx = pidx[:, :, 0]                                          # (C, B)
    best_c = jnp.argmin(pmin, axis=0)                             # (B,)
    score_min = jnp.take_along_axis(pmin, best_c[None, :], axis=0)[0]
    idx = jnp.take_along_axis(pidx, best_c[None, :], axis=0)[0]
    min_mse = (score_min + q_sq) * (1.0 / float(F))               # + ||q||^2, /F once
    return min_mse, idx.astype(jnp.int32)


class NNGParams:
    """Deterministic parameter init mirroring nn.Parameter(torch.zeros(1))."""

    def __init__(self):
        self.dummy = jnp.zeros((1,), jnp.float32)


def nn_g_forward(params, x, y, time_steps=None, *, audio=None, pose,
                 prepared=None, stream_dtype=None):
    """JAX/Pallas equivalent of NN_G.forward.

    x        : tuple/list whose first entry is (B, T, F)
    audio    : (M, F) database of audio features (or pass `prepared=` instead)
    pose     : (M, Tp, P) database of poses
    returns (out (B, Tp, P), internal_losses)
    """
    x0 = x[0]
    min_mse, idx = nn_g_distance_argmin(x0, audio, prepared=prepared,
                                        stream_dtype=stream_dtype)
    del min_mse  # PyTorch discards it too
    out = pose[idx]                          # gather stays in plain JAX/XLA
    internal_losses = [params.dummy.sum()]
    return out, internal_losses


if __name__ == "__main__":
    key = jax.random.PRNGKey(0)
    k1, k2, k3, k4 = jax.random.split(key, 4)

    B, T, F = 2, 8, 32        # batch, time, frequency
    M = 16                    # database size
    Tp, P = 8, 16             # pose time, pose feats

    x0 = jax.random.normal(k1, (B, T, F), dtype=jnp.float32)
    y = jax.random.normal(k2, (B, Tp, P), dtype=jnp.float32)   # unused, as in torch
    audio = jax.random.normal(k3, (M, F), dtype=jnp.float32)
    pose = jax.random.normal(k4, (M, Tp, P), dtype=jnp.float32)

    params = NNGParams()
    out, internal_losses = nn_g_forward(params, (x0,), y, audio=audio, pose=pose)
    out = jax.block_until_ready(out)
    _ = jax.block_until_ready(internal_losses[0])

    # sanity check against pure-JAX reference
    q_ref = x0.mean(axis=1)
    dist_ref = ((audio[:, None, :] - q_ref[None, :, :]) ** 2).mean(-1)
    idx_ref = jnp.argmin(dist_ref, axis=0)
    out_ref = pose[idx_ref]
    min_mse_k, idx_k = nn_g_distance_argmin(x0, audio)
    min_mse_k = jax.block_until_ready(min_mse_k)

    assert out.shape == (B, Tp, P)
    assert jnp.array_equal(idx_k, idx_ref.astype(jnp.int32)), "argmin mismatch"
    assert jnp.allclose(out, out_ref, atol=1e-5), "gather mismatch vs reference"
    assert jnp.allclose(min_mse_k, dist_ref.min(axis=0), atol=1e-3, rtol=1e-4), \
        "min_mse mismatch vs reference"

    print("KERNEL_OK")
</pallas_src>

<mosaic_0001>
module attributes {stable_mosaic.version = 11 : i64} {
  func.func @_nn_g_kernel(%arg0: i32, %arg1: i32, %arg2: memref<2x32xf32, #tpu.memory_space<vmem>>, %arg3: memref<32x128xf32, #tpu.memory_space<vmem>>, %arg4: memref<1x128xf32, #tpu.memory_space<vmem>>, %arg5: memref<1x2x1xf32, #tpu.memory_space<vmem>>, %arg6: memref<1x2x1xi32, #tpu.memory_space<vmem>>, %arg7: memref<2x1xf32, #tpu.memory_space<vmem>>, %arg8: memref<2x1xi32, #tpu.memory_space<vmem>>) attributes {dimension_semantics = [#tpu.dimension_semantics<parallel>, #tpu.dimension_semantics<arbitrary>], iteration_bounds = array<i64: 1, 1>, scalar_prefetch = 0 : i64, scratch_operands = 2 : i64, tpu.core_type = #tpu.core_type<tc>, window_params = [{pipeline_mode = #tpu.pipeline_mode<synchronous>, transform_indices = @transform_0, window_bounds = array<i64: 2, 32>}, {transform_indices = @transform_1, window_bounds = array<i64: 32, 128>}, {transform_indices = @transform_2, window_bounds = array<i64: 1, 128>}, {transform_indices = @transform_3, window_bounds = array<i64: 1, 2, 1>}, {transform_indices = @transform_4, window_bounds = array<i64: 1, 2, 1>}]} {
    %c0_i32 = arith.constant 0 : i32
    %0 = arith.cmpi eq, %arg1, %c0_i32 : i32
    %1 = arith.extui %0 : i1 to i32
    %c0_i32_0 = arith.constant 0 : i32
    %2 = arith.cmpi ne, %1, %c0_i32_0 : i32
    scf.if %2 {
      %cst_22 = arith.constant 0x7F800000 : f32
      %40 = vector.broadcast %cst_22 : f32 to vector<2x1xf32>
      %c0_23 = arith.constant 0 : index
      %c0_24 = arith.constant 0 : index
      %41 = vector.load %arg7[%c0_23, %c0_24] : memref<2x1xf32, #tpu.memory_space<vmem>>, vector<2x1xf32>
      tpu.vector_store %arg7[%c0_23, %c0_24], %40 {strides = array<i32>} : memref<2x1xf32, #tpu.memory_space<vmem>>, vector<2x1xf32>,
      %c0_i32_25 = arith.constant 0 : i32
      %42 = vector.broadcast %c0_i32_25 : i32 to vector<2x1xi32>
      %c0_26 = arith.constant 0 : index
      %c0_27 = arith.constant 0 : index
      %43 = vector.load %arg8[%c0_26, %c0_27] : memref<2x1xi32, #tpu.memory_space<vmem>>, vector<2x1xi32>
      tpu.vector_store %arg8[%c0_26, %c0_27], %42 {strides = array<i32>} : memref<2x1xi32, #tpu.memory_space<vmem>>, vector<2x1xi32>,
    } else {
    }
    %c0 = arith.constant 0 : index
    %c0_1 = arith.constant 0 : index
    %3 = vector.load %arg2[%c0, %c0_1] : memref<2x32xf32, #tpu.memory_space<vmem>>, vector<2x32xf32>
    %c0_2 = arith.constant 0 : index
    %c0_3 = arith.constant 0 : index
    %4 = vector.load %arg3[%c0_2, %c0_3] : memref<32x128xf32, #tpu.memory_space<vmem>>, vector<32x128xf32>
    %cst = arith.constant dense<0.000000e+00> : vector<2x128xf32>
    %5 = tpu.matmul %3, %4, %cst {dimension_numbers = #tpu.dot_dimension_numbers<[1], [0], [0], [1], [0, 0, 1, 1], [], []>} : vector<2x32xf32>, vector<32x128xf32>, vector<2x128xf32> -> vector<2x128xf32>
    %c0_4 = arith.constant 0 : index
    %c0_5 = arith.constant 0 : index
    %6 = vector.load %arg4[%c0_4, %c0_5] : memref<1x128xf32, #tpu.memory_space<vmem>>, vector<1x128xf32>
    %cst_6 = arith.constant 2.000000e+00 : f32
    %7 = vector.broadcast %cst_6 : f32 to vector<2x128xf32>
    %8 = arith.mulf %7, %5 : vector<2x128xf32>
    %9 = vector.broadcast %6 : vector<1x128xf32> to vector<2x128xf32>
    %10 = arith.subf %9, %8 : vector<2x128xf32>
    %c1_i32 = arith.constant 1 : i32
    %11 = arith.muli %arg0, %c1_i32 : i32
    %12 = arith.addi %11, %arg1 : i32
    %c128_i32 = arith.constant 128 : i32
    %13 = arith.muli %12, %c128_i32 : i32
    %14 = tpu.iota {dimensions = array<i32: 1>} : vector<2x128xi32>
    %15 = vector.broadcast %13 : i32 to vector<2x128xi32>
    %16 = arith.addi %15, %14 : vector<2x128xi32>
    %c16_i32 = arith.constant 16 : i32
    %17 = vector.broadcast %c16_i32 : i32 to vector<2x128xi32>
    %18 = arith.cmpi slt, %16, %17 : vector<2x128xi32>
    %cst_7 = arith.constant 0x7F800000 : f32
    %19 = vector.broadcast %cst_7 : f32 to vector<2x128xf32>
    %20 = arith.select %18, %10, %19 : vector<2x128xi1>, vector<2x128xf32>
    %cst_8 = arith.constant dense<0x7F800000> : vector<2xf32>
    %21 = vector.multi_reduction <minimumf>, %20, %cst_8 [1] : vector<2x128xf32> to vector<2xf32>
    %22 = vector.shape_cast %21 : vector<2xf32> to vector<2x1xf32>
    %23 = vector.broadcast %22 : vector<2x1xf32> to vector<2x128xf32>
    %24 = arith.cmpf oeq, %20, %23 : vector<2x128xf32>
    %c2147483647_i32 = arith.constant 2147483647 : i32
    %25 = vector.broadcast %c2147483647_i32 : i32 to vector<2x128xi32>
    %26 = arith.select %24, %16, %25 : vector<2x128xi1>, vector<2x128xi32>
    %cst_9 = arith.constant dense<2147483647> : vector<2xi32>
    %27 = vector.multi_reduction <minsi>, %26, %cst_9 [1] : vector<2x128xi32> to vector<2xi32>
    %28 = vector.shape_cast %27 : vector<2xi32> to vector<2x1xi32>
    %c0_10 = arith.constant 0 : index
    %c0_11 = arith.constant 0 : index
    %29 = vector.load %arg7[%c0_10, %c0_11] : memref<2x1xf32, #tpu.memory_space<vmem>>, vector<2x1xf32>
    %30 = arith.cmpf olt, %22, %29 : vector<2x1xf32>
    %c0_12 = arith.constant 0 : index
    %c0_13 = arith.constant 0 : index
    %31 = vector.load %arg7[%c0_12, %c0_13] : memref<2x1xf32, #tpu.memory_space<vmem>>, vector<2x1xf32>
    %32 = arith.select %30, %22, %31 : vector<2x1xi1>, vector<2x1xf32>
    %c0_14 = arith.constant 0 : index
    %c0_15 = arith.constant 0 : index
    %33 = vector.load %arg7[%c0_14, %c0_15] : memref<2x1xf32, #tpu.memory_space<vmem>>, vector<2x1xf32>
    tpu.vector_store %arg7[%c0_14, %c0_15], %32 {strides = array<i32>} : memref<2x1xf32, #tpu.memory_space<vmem>>, vector<2x1xf32>,
    %c0_16 = arith.constant 0 : index
    %c0_17 = arith.constant 0 : index
    %34 = vector.load %arg8[%c0_16, %c0_17] : memref<2x1xi32, #tpu.memory_space<vmem>>, vector<2x1xi32>
    %35 = arith.select %30, %28, %34 : vector<2x1xi1>, vector<2x1xi32>
    %c0_18 = arith.constant 0 : index
    %c0_19 = arith.constant 0 : index
    %36 = vector.load %arg8[%c0_18, %c0_19] : memref<2x1xi32, #tpu.memory_space<vmem>>, vector<2x1xi32>
    tpu.vector_store %arg8[%c0_18, %c0_19], %35 {strides = array<i32>} : memref<2x1xi32, #tpu.memory_space<vmem>>, vector<2x1xi32>,
    %c0_i32_20 = arith.constant 0 : i32
    %37 = arith.cmpi eq, %arg1, %c0_i32_20 : i32
    %38 = arith.extui %37 : i1 to i32
    %c0_i32_21 = arith.constant 0 : i32
    %39 = arith.cmpi ne, %38, %c0_i32_21 : i32
    scf.if %39 {
      %c0_22 = arith.constant 0 : index
      %c0_23 = arith.constant 0 : index
      %40 = vector.load %arg7[%c0_22, %c0_23] : memref<2x1xf32, #tpu.memory_space<vmem>>, vector<2x1xf32>
      %41 = vector.shape_cast %40 : vector<2x1xf32> to vector<1x2x1xf32>
      %c0_24 = arith.constant 0 : index
      %c0_25 = arith.constant 0 : index
      %c0_26 = arith.constant 0 : index
      %42 = vector.load %arg5[%c0_24, %c0_25, %c0_26] : memref<1x2x1xf32, #tpu.memory_space<vmem>>, vector<1x2x1xf32>
      tpu.vector_store %arg5[%c0_24, %c0_25, %c0_26], %41 {strides = array<i32>} : memref<1x2x1xf32, #tpu.memory_space<vmem>>, vector<1x2x1xf32>,
      %c0_27 = arith.constant 0 : index
      %c0_28 = arith.constant 0 : index
      %43 = vector.load %arg8[%c0_27, %c0_28] : memref<2x1xi32, #tpu.memory_space<vmem>>, vector<2x1xi32>
      %44 = vector.shape_cast %43 : vector<2x1xi32> to vector<1x2x1xi32>
      %c0_29 = arith.constant 0 : index
      %c0_30 = arith.constant 0 : index
      %c0_31 = arith.constant 0 : index
      %45 = vector.load %arg6[%c0_29, %c0_30, %c0_31] : memref<1x2x1xi32, #tpu.memory_space<vmem>>, vector<1x2x1xi32>
      tpu.vector_store %arg6[%c0_29, %c0_30, %c0_31], %44 {strides = array<i32>} : memref<1x2x1xi32, #tpu.memory_space<vmem>>, vector<1x2x1xi32>,
    } else {
    }
    return
  }
  func.func @transform_0(%arg0: i32, %arg1: i32) -> (i32, i32) {
    %c0_i32 = arith.constant 0 : i32
    %c0_i32_0 = arith.constant 0 : i32
    %c0_i32_1 = arith.constant 0 : i32
    return %c0_i32, %c0_i32_0 : i32, i32
  }
  func.func @transform_1(%arg0: i32, %arg1: i32) -> (i32, i32) {
    %c1_i32 = arith.constant 1 : i32
    %0 = arith.muli %arg0, %c1_i32 : i32
    %1 = arith.addi %0, %arg1 : i32
    %c0_i32 = arith.constant 0 : i32
    %c0_i32_0 = arith.constant 0 : i32
    return %c0_i32, %1 : i32, i32
  }
  func.func @transform_2(%arg0: i32, %arg1: i32) -> (i32, i32) {
    %c1_i32 = arith.constant 1 : i32
    %0 = arith.muli %arg0, %c1_i32 : i32
    %1 = arith.addi %0, %arg1 : i32
    %c0_i32 = arith.constant 0 : i32
    %c0_i32_0 = arith.constant 0 : i32
    return %c0_i32, %1 : i32, i32
  }
  func.func @transform_3(%arg0: i32, %arg1: i32) -> (i32, i32, i32) {
    %c0_i32 = arith.constant 0 : i32
    %c0_i32_0 = arith.constant 0 : i32
    %c0_i32_1 = arith.constant 0 : i32
    return %arg0, %c0_i32, %c0_i32_0 : i32, i32, i32
  }
  func.func @transform_4(%arg0: i32, %arg1: i32) -> (i32, i32, i32) {
    %c0_i32 = arith.constant 0 : i32
    %c0_i32_0 = arith.constant 0 : i32
    %c0_i32_1 = arith.constant 0 : i32
    return %arg0, %c0_i32, %c0_i32_0 : i32, i32, i32
  }
}

</mosaic_0001>

<llo_original>
// kernel: tpu_custom_call.1
$region0: #{tpu_custom_call.1}
  #allocation0 [shape = 'u32[]', space=smem, size = 0x4, offset = 0x4, fixed_abs, tag = 'smem constant byte address 0x4 - core index']
  #allocation1 [shape = 'u32[144,128]{1,0:T(1,128)}', space=vmem, size = 0x12000, scoped, tag = 'internal scratch']
  #allocation2 [shape = 'f32[2,1]{1,0:T(2,128)}', space=vmem, size = 0x400, scoped, tag = 'scratch operand']
  #allocation3 [shape = 's32[2,1]{1,0:T(2,128)}', space=vmem, size = 0x400, scoped, tag = 'scratch operand']
  %s0 = inlined_call_operand.hbm [shape: f32[2,32], index: 0, kind: input, shape index: {}]
  %s1 = inlined_call_operand.hbm [shape: f32[32,128], index: 1, kind: input, shape index: {}]
  %s2 = inlined_call_operand.vmem [shape: f32[1,128], index: 2, kind: input, shape index: {}]
  %s3 = inlined_call_operand.vmem [shape: f32[1,2,1], index: 3, kind: output, shape index: {0}]
  %s4 = inlined_call_operand.vmem [shape: s32[1,2,1], index: 4, kind: output, shape index: {1}]
  %5 = xla_tuple %s3, %s4
  %s6 = sld [smem:[#allocation0]]
  $region46: #{tpu_custom_call.1} parent=0
    _
  %s8 = ssub.s32 1, %s6
  %s9 = scalar_select 0, %s8, %s6
  $region1: #{tpu_custom_call.1} parent=0
    #allocation4 [shape = 'u8[1024]{0}', space=vmem, size = 0x400, scoped, tag = 'input window, operand 0, single buffered']
    #allocation5 [shape = 's32[1]{0}', space=sflag, size = 0x4, scoped, tag = 'scoped memory for tpu_custom_call.1']
    #allocation6 [shape = 'u8[16384]{0}', space=vmem, size = 0x4000, scoped, tag = 'input window, operand 1, single buffered']
    #allocation7 [shape = 's32[1]{0}', space=sflag, size = 0x4, scoped, tag = 'scoped memory for tpu_custom_call.1']
    %10 = vsyncpa [#allocation5], 0
    %11 = vsyncpa [#allocation7], 0
    // Predicated region
    $region2: #{tpu_custom_call.1} parent=1 // pred_check
      _
    $region3: #{tpu_custom_call.1} parent=1 // pred_check_branch
      %13 = sbr.rel (0) target = $region5
    $region4: #{tpu_custom_call.1} parent=1 // pred_region
      %s15 = ssub.s32 32, 32
      %16 = vsyncadd [#allocation5], %s15
      %s18 = sshll.u32 [#allocation4], 4
      %s19 = int_to_ptr.vmem [resolvable:$true] %s18
      %21 = dma.hbm_to_vmem [thread:$0]  %s0, 32, %s19, [#allocation5]
    $region5: #{tpu_custom_call.1} parent=1 // pred_fallthru
      _
    // Predicated region
    $region6: #{tpu_custom_call.1} parent=1 // pred_check
      _
    $region7: #{tpu_custom_call.1} parent=1 // pred_check_branch
      %23 = sbr.rel (0) target = $region9
    $region8: #{tpu_custom_call.1} parent=1 // pred_region
      %s24 = sadd.s32 0, 0
      %s26 = ssub.s32 512, 512
      %27 = vsyncadd [#allocation7], %s26
      %s28 = smul.addr %s24, 128
      %s29 = scalar_lea.hbm %s1, %s28
      %s30 = sshll.u32 [#allocation6], 4
      %s31 = int_to_ptr.vmem [resolvable:$true] %s30
      %36 = dma.hbm_to_vmem [thread:$0]  %s29, 512, %s31, [#allocation7], 128, 128, 8
    $region9: #{tpu_custom_call.1} parent=1 // pred_fallthru
      _
    // Predicated region
    $region10: #{tpu_custom_call.1} parent=1 // pred_check
      _
    $region11: #{tpu_custom_call.1} parent=1 // pred_check_branch
      %38 = sbr.rel (0) target = $region13
    $region12: #{tpu_custom_call.1} parent=1 // pred_region
      %s39 = sadd.s32 0, 0
      %p40 = scmp.lt.s32.totalorder %s39, 0
      %s41 = scalar_select %p40, %s39, 0
      %s42 = scalar_lea.vmem %s2, %s41
      %s43 = sadd.s32 0, 0
    $region13: #{tpu_custom_call.1} parent=1 // pred_fallthru
      _
    // Predicated region
    $region14: #{tpu_custom_call.1} parent=1 // pred_check
      _
    $region15: #{tpu_custom_call.1} parent=1 // pred_check_branch
      %45 = sbr.rel (0) target = $region17
    $region16: #{tpu_custom_call.1} parent=1 // pred_region
      %46 = dma.done [#allocation5], 32
    $region17: #{tpu_custom_call.1} parent=1 // pred_fallthru
      _
    // Predicated region
    $region18: #{tpu_custom_call.1} parent=1 // pred_check
      _
    $region19: #{tpu_custom_call.1} parent=1 // pred_check_branch
      %48 = sbr.rel (0) target = $region21
    $region20: #{tpu_custom_call.1} parent=1 // pred_region
      %49 = dma.done [#allocation7], 512
    $region21: #{tpu_custom_call.1} parent=1 // pred_fallthru
      _
    %s50 = sadd.s32 0, 0
    %p51 = scmp.lt.s32.totalorder %s50, 0
    %s52 = scalar_select %p51, %s50, 0
    %s53 = scalar_lea.vmem %s2, %s52
    %s54 = sadd.s32 0, 0
    %s55 = sadd.s32 0, 0
    %p56 = scmp.lt.s32.totalorder %s55, 0
    %s57 = scalar_select %p56, %s55, 0
    %s58 = scalar_lea.vmem %s2, %s57
    %s59 = sadd.s32 0, 0
    %p60 = scmp.eq.s32.totalorder 0, 0
    // Predicated region
    $region22: #{tpu_custom_call.1} parent=1 // pred_check
      %p61 = pneg %p60
    $region23: #{tpu_custom_call.1} parent=1 // pred_check_branch
      %63 = sbr.rel (%p61) target = $region25
    $region24: #{tpu_custom_call.1} parent=1 // pred_region
      %vm64 = vcmask 1024
      %65 = vst.msk [vmem:[#allocation2] sm:$0x3] %vm64, inf
      %66 = vst.msk [vmem:[#allocation3] sm:$0x3] %vm64, 0
    $region25: #{tpu_custom_call.1} parent=1 // pred_fallthru
      _
    %v67 = vld [vmem:[#allocation4] sm:$0x3]
    %v68 = vld [vmem:[#allocation6] sm:$0xff]
    %v69 = vld [vmem:[#allocation6 + $0x8] sm:$0xff]
    %v70 = vld [vmem:[#allocation6 + $0x10] sm:$0xff]
    %v71 = vld [vmem:[#allocation6 + $0x18] sm:$0xff]
    %vm72 = vcmask 261120
    %v74 = vsel %vm72, %v67, 0
    %76 = vmatprep.subr.mxu0 0.0
    %77 = vmatpush1.msra.mxu0 %v68
    %78 = vmatprep.subr.mxu0 0.0
    %79 = vmatpush1.msra.mxu0 %v69
    %80 = vmatprep.subr.mxu0 0.0
    %81 = vmatpush1.msra.mxu0 %v70
    %82 = vmatprep.subr.mxu0 0.0
    %83 = vmatpush1.msra.mxu0 %v71
    %84 = vmatprep.subr.mxu0 0.0
    %85 = vmatpush1.msra.mxu0 0.0
    %86 = vmatprep.subr.mxu0 0.0
    %87 = vmatpush1.msra.mxu0 0.0
    %88 = vmatprep.subr.mxu0 0.0
    %89 = vmatpush1.msra.mxu0 0.0
    %90 = vmatprep.subr.mxu0 0.0
    %91 = vmatpush1.msra.mxu0 0.0
    %92 = vmatprep.subr.mxu0 0.0
    %93 = vmatpush1.msra.mxu0 0.0
    %94 = vmatprep.subr.mxu0 0.0
    %95 = vmatpush1.msra.mxu0 0.0
    %96 = vmatprep.subr.mxu0 0.0
    %97 = vmatpush1.msra.mxu0 0.0
    %98 = vmatprep.subr.mxu0 0.0
    %99 = vmatpush1.msra.mxu0 0.0
    %100 = vmatprep.subr.mxu0 0.0
    %101 = vmatpush1.msra.mxu0 0.0
    %102 = vmatprep.subr.mxu0 0.0
    %103 = vmatpush1.msra.mxu0 0.0
    %104 = vmatprep.subr.mxu0 0.0
    %105 = vmatpush1.msra.mxu0 0.0
    %106 = vmatprep.subr.mxu0 0.0
    %107 = vmatpush1.msra.mxu0 0.0
    %108 = vmatprep.subr.mxu0 0.0
    %109 = vmatpush1.msra.mxu0 0.0
    %110 = vmatprep.subr.mxu0 0.0
    %111 = vmatpush1.msra.mxu0 0.0
    %112 = vmatprep.subr.mxu0 0.0
    %113 = vmatpush1.msra.mxu0 0.0
    %114 = vmatprep.subr.mxu0 0.0
    %115 = vmatpush1.msra.mxu0 0.0
    %116 = vmatprep.subr.mxu0 0.0
    %117 = vmatpush1.msra.mxu0 0.0
    %118 = vmatprep.subr.mxu0 0.0
    %119 = vmatpush1.msra.mxu0 0.0
    %120 = vmatprep.subr.mxu0 0.0
    %121 = vmatpush1.msra.mxu0 0.0
    %122 = vmatprep.subr.mxu0 0.0
    %123 = vmatpush1.msra.mxu0 0.0
    %124 = vmatprep.subr.mxu0 0.0
    %125 = vmatpush1.msra.mxu0 0.0
    %126 = vmatprep.subr.mxu0 0.0
    %127 = vmatpush1.msra.mxu0 0.0
    %128 = vmatprep.subr.mxu0 0.0
    %129 = vmatpush1.msra.mxu0 0.0
    %130 = vmatprep.subr.mxu0 0.0
    %131 = vmatpush1.msra.mxu0 0.0
    %132 = vmatprep.subr.mxu0 0.0
    %133 = vmatpush1.msra.mxu0 0.0
    %134 = vmatprep.subr.mxu0 0.0
    %135 = vmatpush1.msra.mxu0 0.0
    %136 = vmatprep.subr.mxu0 0.0
    %137 = vmatpush1.msra.mxu0 0.0
    %138 = vmatprep.subr.mxu0 0.0
    %139 = vmatpush1.msra.mxu0 0.0
    %140 = vmatprep.mubr.f32.mxu0 0.0
    %141 = vmatmul.mubr.f32.gmra.mrb[0].mxu0 %v74
    %v142 = vpop.f32.mrb[0].mxu0
    %v143 = vadd.f32 0.0, %v142
    %v144 = vpop.f32.mrb[0].mxu0
    %145 = vdwg.mxu0
    %v146 = vld [vmem:[%s58] sm:$0x1]
    %v147 = vmul.f32 %v143, 2.0
    %v149 = vlaneseq
    %v150 = vshrl.u32 %v149, 7
    %v151 = vsub.s32 0, %v150
    %v152 = vrot.slane %v146, %v151
    %v154 = vsub.f32 %v152, %v147
    %s155 = sadd.s32 0, 0
    %s156 = smul.u32 %s155, 128
    %v157 = vlaneseq
    %v158 = vand.u32 %v157, 127
    %v159 = vstv %s156
    %v160 = vadd.s32 %v159, %v158
    %vm161 = vcmp.lt.s32.totalorder %v160, 16
    %v162 = vsel %vm161, %v154, inf
    %vm163 = vcmask 1041408
    %v164 = vsel %vm163, %v162, inf
    %165 = vmin.xlane.f32.xlu0 %v164
    %v166 = vpop.xlane.xlu0 %165
    %vm167 = vcmp.eq.f32.partialorder %v162, %v166
    %v168 = vsel %vm167, %v160, 2147483647
    %v169 = vsel %vm163, %v168, 2147483647
    %v170 = vand.u32 %v169, 65535
    %v171 = vshra.s32 %v169, 16
    %v172 = vcvt.s32.f32 %v170
    %v173 = vcvt.s32.f32 %v171
    %174 = vmin.xlane.f32.xlu0 %v173
    %v175 = vpop.xlane.xlu0 %174
    %vm176 = vcmp.eq.f32.partialorder %v173, %v175
    %v177 = vsel %vm176, %v172, inf
    %178 = vmin.xlane.f32.xlu0 %v177
    %v179 = vpop.xlane.xlu0 %178
    %v180 = vcvt.f32.s32 %v179
    %v181 = vcvt.f32.s32 %v175
    %v182 = vshll.u32 %v181, 16
    %v183 = vadd.s32 %v182, %v180
    %v184 = vld [vmem:[#allocation2] sm:$0x3]
    %vm185 = vcmp.lt.f32.partialorder %v166, %v184
    %v186 = vsel %vm185, %v166, %v184
    %vm187 = vcmask 1024
    %188 = vst.msk [vmem:[#allocation2] sm:$0x3] %vm187, %v186
    %v189 = vld [vmem:[#allocation3] sm:$0x3]
    %v190 = vsel %vm185, %v183, %v189
    %191 = vst.msk [vmem:[#allocation3] sm:$0x3] %vm187, %v190
    // Predicated region
    $region26: #{tpu_custom_call.1} parent=1 // pred_check
      %p192 = pneg %p60
    $region27: #{tpu_custom_call.1} parent=1 // pred_check_branch
      %194 = sbr.rel (%p192) target = $region29
    $region28: #{tpu_custom_call.1} parent=1 // pred_region
      %v195 = vld [vmem:[#allocation2] sm:$0x3]
      %196 = vst.msk [vmem:[%s3] sm:$0x3] %vm187, %v195
      %v197 = vld [vmem:[#allocation3] sm:$0x3]
      %198 = vst.msk [vmem:[%s4] sm:$0x3] %vm187, %v197
    $region29: #{tpu_custom_call.1} parent=1 // pred_fallthru
      _
    // Predicated region
    $region30: #{tpu_custom_call.1} parent=1 // pred_check
      _
    $region31: #{tpu_custom_call.1} parent=1 // pred_check_branch
      %200 = sbr.rel (0) target = $region33
    $region32: #{tpu_custom_call.1} parent=1 // pred_region
      _
    $region33: #{tpu_custom_call.1} parent=1 // pred_fallthru
      _
    // Predicated region
    $region34: #{tpu_custom_call.1} parent=1 // pred_check
      _
    $region35: #{tpu_custom_call.1} parent=1 // pred_check_branch
      %202 = sbr.rel (0) target = $region37
    $region36: #{tpu_custom_call.1} parent=1 // pred_region
      _
    $region37: #{tpu_custom_call.1} parent=1 // pred_fallthru
      _
    // Predicated region
    $region38: #{tpu_custom_call.1} parent=1 // pred_check
      _
    $region39: #{tpu_custom_call.1} parent=1 // pred_check_branch
      %204 = sbr.rel (0) target = $region41
    $region40: #{tpu_custom_call.1} parent=1 // pred_region
      _
    $region41: #{tpu_custom_call.1} parent=1 // pred_fallthru
      _
    // Predicated region
    $region42: #{tpu_custom_call.1} parent=1 // pred_check
      _
    $region43: #{tpu_custom_call.1} parent=1 // pred_check_branch
      %206 = sbr.rel (0) target = $region45
    $region44: #{tpu_custom_call.1} parent=1 // pred_region
      _
    $region45: #{tpu_custom_call.1} parent=1 // pred_fallthru
      _
    %207 = vsyncpa [#allocation5], 1
    %208 = vsyncpa [#allocation7], 1

</llo_original>
